<compile_context>
chip_gen: v5e
topology: v5e:2x2
jax: 0.10.0
libtpu: 0.0.40
codegen_flags: <defaults>
</compile_context>

<pallas_src>
import numpy as np
import jax
import jax.numpy as jnp
from jax import lax
from jax.experimental import pallas as pl
from jax.experimental.pallas import tpu as pltpu

C_IN, C_OUT, K = 3, 32, 3
H = W = 6                          # spatial size implied by dense1 in_features = 32*3*3
PH, PW = H // 2, W // 2            # pooled spatial size (3, 3)
HID, OUT = 128, 10
FEAT = C_OUT * PH * PW             # 288
FEAT_PAD = 384                     # 288 zero-padded to 3*128 lanes (128-aligned pool slices)
IN_FLAT = C_IN * H * W             # 108 flattened image elements
IN_PAD = 128                       # image row padded to 128 lanes; lane 108 = constant 1.0
BIAS_ROW = IN_FLAT                 # row of the folded matrix carrying conv bias / b1 routing
OUT_PAD = 128                      # lane-dense logits block; sliced to 10 in the wrapper
SUB = 8                            # f32 sublane multiple for batch padding / tiling


def fused_kernel(x_ref, m_ref, w1_ref, w2_ref, o_ref):
    """Whole forward pass for one batch tile, everything resident in VMEM.

    x_ref : (TB, 128)  f32   flattened image (108) | 1.0 | zeros
    m_ref : (128, 1536) bf16 conv-as-matmul weights; 4 pool-quadrant blocks of 384 lanes,
                             conv bias on row 108, and a 1.0 route (row 108 -> lane q*384+288)
    w1_ref: (384, 128) bf16  dense1 weight, input features permuted to (ph,pw,c); row 288 = b1
    w2_ref: (136, 128) bf16  rows 0..127 = dense2 weight (transposed, lane-padded), row 128 = b2
    o_ref : (TB, 128)  f32   lane-dense logits (columns 10..127 are zero)
    """
    # Conv2d(3,32,3,1,1) + bias + ReLU as one lane-dense bf16 MXU matmul (bias folded via the
    # constant-1 input lane).
    x = x_ref[...].astype(jnp.bfloat16)
    y = jnp.dot(x, m_ref[...], preferred_element_type=jnp.float32)
    y = jnp.maximum(y, 0.0)                                        # (TB, 4*FEAT_PAD)

    # MaxPool2d(2): the four window elements (dh,dw) of every pooled position sit at the same
    # lane offset of the four 384-lane (128-aligned) blocks -> pool = max of 4 static slices.
    # Lane 288 of the result is forced to 1.0 (b1 routing); lanes 289..383 stay 0.
    feat = jnp.maximum(
        jnp.maximum(y[:, 0 * FEAT_PAD:1 * FEAT_PAD], y[:, 1 * FEAT_PAD:2 * FEAT_PAD]),
        jnp.maximum(y[:, 2 * FEAT_PAD:3 * FEAT_PAD], y[:, 3 * FEAT_PAD:4 * FEAT_PAD]))

    # Linear(288,128) + ReLU (b1 folded via feat lane 288 == 1.0).
    h = jnp.dot(feat.astype(jnp.bfloat16), w1_ref[...], preferred_element_type=jnp.float32)
    h = jnp.maximum(h, 0.0)                                        # (TB, HID)

    # Linear(128,10) with b2 packed as an extra weight row; lane-dense (TB,128) store.
    w2 = w2_ref[...]
    o_ref[...] = (jnp.dot(h.astype(jnp.bfloat16), w2[:HID, :],
                          preferred_element_type=jnp.float32)
                  + w2[HID:HID + 1, :].astype(jnp.float32))


def prepare_params(params):
    """One-time repack of PyTorch-shaped parameters into the kernel's (bf16) layouts."""
    w_conv, b_conv, w1, b1, w2, b2 = (np.asarray(p, np.float32) for p in params)

    # Fold conv taps, conv zero-padding, pool-window layout, flatten order AND the conv bias
    # (on the constant-1 input row) into one matrix. Column index =
    # q*FEAT_PAD + (ph*PW + pw)*C_OUT + c_out with q = 2*dh + dw selecting the pool-window
    # element at spatial (2ph+dh, 2pw+dw). Column q*FEAT_PAD + FEAT is a 1.0 route used to
    # carry b1 through the conv matmul + ReLU + pool max.
    m = np.zeros((IN_PAD, 4 * FEAT_PAD), np.float32)
    for dh in range(2):
        for dw in range(2):
            q = 2 * dh + dw
            m[BIAS_ROW, q * FEAT_PAD + FEAT] = 1.0              # b1 routing lane
            for ph in range(PH):
                for pw in range(PW):
                    h_, w_ = 2 * ph + dh, 2 * pw + dw
                    col0 = q * FEAT_PAD + (ph * PW + pw) * C_OUT
                    m[BIAS_ROW, col0:col0 + C_OUT] = b_conv     # conv bias via constant-1 lane
                    for kh in range(K):
                        for kw in range(K):
                            hh, ww = h_ + kh - 1, w_ + kw - 1   # padding = 1
                            if 0 <= hh < H and 0 <= ww < W:     # taps in the pad are 0
                                for ci in range(C_IN):
                                    m[ci * H * W + hh * W + ww,
                                      col0:col0 + C_OUT] = w_conv[:, ci, kh, kw]

    # dense1: permute input features (c,ph,pw) -> (ph,pw,c), transpose, pad 288->384; row 288 = b1.
    w1p = w1.reshape(HID, C_OUT, PH, PW).transpose(2, 3, 1, 0).reshape(FEAT, HID)
    w1p_full = np.zeros((FEAT_PAD, HID), np.float32)
    w1p_full[:FEAT] = w1p
    w1p_full[FEAT] = b1

    # dense2: transpose, lane-pad 10->128, append b2 as row 128 (rows 129..135 keep sublane mult-8).
    w2pack = np.zeros((HID + SUB, OUT_PAD), np.float32)
    w2pack[:HID, :OUT] = w2.T
    w2pack[HID, :OUT] = b2

    return (jnp.asarray(m, jnp.bfloat16),
            jnp.asarray(w1p_full, jnp.bfloat16),
            jnp.asarray(w2pack, jnp.bfloat16))


@jax.jit
def module1_forward(x, prepared):
    m, w1p, w2pack = prepared
    B = x.shape[0]

    # Pad batch to a sublane multiple; tile with TB=128 (grid axis "parallel" -> v7x 2-TC sharding).
    TB_MAX = 128
    Bp = -(-B // SUB) * SUB
    if Bp <= TB_MAX:
        TB = Bp
    else:
        Bp = -(-B // TB_MAX) * TB_MAX
        TB = TB_MAX
    n_tiles = Bp // TB

    # Lane-dense input rows: flattened image | constant 1.0 (bias route) | zero pad to 128.
    xf = x.reshape(B, IN_FLAT).astype(jnp.float32)
    x2 = jnp.zeros((Bp, IN_PAD), jnp.float32)
    x2 = x2.at[:B, :IN_FLAT].set(xf)
    x2 = x2.at[:B, IN_FLAT].set(1.0)

    flops = 2 * Bp * (IN_PAD * 4 * FEAT_PAD + FEAT_PAD * HID + HID * OUT_PAD)
    bytes_accessed = (x2.size * 4 + Bp * OUT_PAD * 4
                      + m.size * 2 + w1p.size * 2 + w2pack.size * 2)

    out = pl.pallas_call(
        fused_kernel,
        out_shape=jax.ShapeDtypeStruct((Bp, OUT_PAD), jnp.float32),
        grid=(n_tiles,),
        in_specs=[
            pl.BlockSpec((TB, IN_PAD), lambda i: (i, 0)),
            pl.BlockSpec((IN_PAD, 4 * FEAT_PAD), lambda i: (0, 0)),   # grid-invariant: fetched once
            pl.BlockSpec((FEAT_PAD, HID), lambda i: (0, 0)),
            pl.BlockSpec((HID + SUB, OUT_PAD), lambda i: (0, 0)),
        ],
        out_specs=pl.BlockSpec((TB, OUT_PAD), lambda i: (i, 0)),
        compiler_params=pltpu.CompilerParams(dimension_semantics=("parallel",)),
        cost_estimate=pl.CostEstimate(flops=flops, transcendentals=0,
                                      bytes_accessed=bytes_accessed),
    )(x2, m, w1p, w2pack)

    return out[:B, :OUT]


def ref_forward(x, params):
    # Pure-JAX f32 reference mirroring PyTorch semantics (Linear: x @ W.T + b).
    w_conv, b_conv, w1, b1, w2, b2 = params
    B = x.shape[0]
    y = lax.conv_general_dilated(x, w_conv, window_strides=(1, 1),
                                 padding=((1, 1), (1, 1)),
                                 dimension_numbers=("NCHW", "OIHW", "NCHW"))
    y = jnp.maximum(y + b_conv[None, :, None, None], 0.0)
    y = y.reshape(B, C_OUT, PH, 2, PW, 2).max(axis=(3, 5))
    y = y.reshape(B, FEAT)
    h = jnp.maximum(y @ w1.T + b1, 0.0)
    return h @ w2.T + b2


if __name__ == "__main__":
    key = jax.random.PRNGKey(0)
    k = jax.random.split(key, 7)
    # Deterministic synthetic parameters (PyTorch-shaped: conv OIHW, Linear (out, in)).
    w_conv = jax.random.normal(k[0], (C_OUT, C_IN, K, K), jnp.float32) * 0.1
    b_conv = jax.random.normal(k[1], (C_OUT,), jnp.float32) * 0.1
    w1 = jax.random.normal(k[2], (HID, FEAT), jnp.float32) * 0.05
    b1 = jax.random.normal(k[3], (HID,), jnp.float32) * 0.05
    w2 = jax.random.normal(k[4], (OUT, HID), jnp.float32) * 0.05
    b2 = jax.random.normal(k[5], (OUT,), jnp.float32) * 0.05
    params = (w_conv, b_conv, w1, b1, w2, b2)
    prepared = prepare_params(params)          # one-time weight repack/cast (not per forward)

    x = jax.random.normal(k[6], (2, C_IN, H, W), jnp.float32)    # NCHW input, batch = 2

    out = jax.block_until_ready(module1_forward(x, prepared))
    ref = jax.block_until_ready(ref_forward(x, params))

    assert out.shape == (2, OUT), out.shape
    # Tolerance loosened vs the f32 reference because weights are stored in bf16 on purpose.
    assert jnp.allclose(out, ref, atol=2e-2, rtol=2e-2), "mismatch vs JAX reference"
    print("KERNEL_OK")
</pallas_src>

<mosaic_0001>
module attributes {stable_mosaic.version = 11 : i64} {
  func.func @fused_kernel(%arg0: i32, %arg1: memref<8x128xf32, #tpu.memory_space<vmem>>, %arg2: memref<128x1536xbf16, #tpu.memory_space<vmem>>, %arg3: memref<384x128xbf16, #tpu.memory_space<vmem>>, %arg4: memref<136x128xbf16, #tpu.memory_space<vmem>>, %arg5: memref<8x128xf32, #tpu.memory_space<vmem>>) attributes {dimension_semantics = [#tpu.dimension_semantics<parallel>], iteration_bounds = array<i64: 1>, scalar_prefetch = 0 : i64, scratch_operands = 0 : i64, tpu.core_type = #tpu.core_type<tc>, window_params = [{transform_indices = @transform_0, window_bounds = array<i64: 8, 128>}, {pipeline_mode = #tpu.pipeline_mode<synchronous>, transform_indices = @transform_1, window_bounds = array<i64: 128, 1536>}, {pipeline_mode = #tpu.pipeline_mode<synchronous>, transform_indices = @transform_2, window_bounds = array<i64: 384, 128>}, {pipeline_mode = #tpu.pipeline_mode<synchronous>, transform_indices = @transform_3, window_bounds = array<i64: 136, 128>}, {transform_indices = @transform_4, window_bounds = array<i64: 8, 128>}]} {
    %c0 = arith.constant 0 : index
    %c0_0 = arith.constant 0 : index
    %0 = vector.load %arg1[%c0, %c0_0] : memref<8x128xf32, #tpu.memory_space<vmem>>, vector<8x128xf32>
    %1 = arith.truncf %0 : vector<8x128xf32> to vector<8x128xbf16>
    %c0_1 = arith.constant 0 : index
    %c0_2 = arith.constant 0 : index
    %2 = vector.load %arg2[%c0_1, %c0_2] : memref<128x1536xbf16, #tpu.memory_space<vmem>>, vector<128x1536xbf16>
    %cst = arith.constant dense<0.000000e+00> : vector<8x1536xf32>
    %3 = tpu.matmul %1, %2, %cst {dimension_numbers = #tpu.dot_dimension_numbers<[1], [0], [0], [1], [0, 0, 1, 1], [], []>} : vector<8x128xbf16>, vector<128x1536xbf16>, vector<8x1536xf32> -> vector<8x1536xf32>
    %cst_3 = arith.constant 0.000000e+00 : f32
    %4 = vector.broadcast %cst_3 : f32 to vector<8x1536xf32>
    %5 = arith.maximumf %3, %4 : vector<8x1536xf32>
    %6 = vector.extract_strided_slice %5 {offsets = [0, 0], sizes = [8, 384], strides = [1, 1]} : vector<8x1536xf32> to vector<8x384xf32>
    %7 = vector.extract_strided_slice %5 {offsets = [0, 384], sizes = [8, 384], strides = [1, 1]} : vector<8x1536xf32> to vector<8x384xf32>
    %8 = arith.maximumf %6, %7 : vector<8x384xf32>
    %9 = vector.extract_strided_slice %5 {offsets = [0, 768], sizes = [8, 384], strides = [1, 1]} : vector<8x1536xf32> to vector<8x384xf32>
    %10 = vector.extract_strided_slice %5 {offsets = [0, 1152], sizes = [8, 384], strides = [1, 1]} : vector<8x1536xf32> to vector<8x384xf32>
    %11 = arith.maximumf %9, %10 : vector<8x384xf32>
    %12 = arith.maximumf %8, %11 : vector<8x384xf32>
    %13 = arith.truncf %12 : vector<8x384xf32> to vector<8x384xbf16>
    %c0_4 = arith.constant 0 : index
    %c0_5 = arith.constant 0 : index
    %14 = vector.load %arg3[%c0_4, %c0_5] : memref<384x128xbf16, #tpu.memory_space<vmem>>, vector<384x128xbf16>
    %cst_6 = arith.constant dense<0.000000e+00> : vector<8x128xf32>
    %15 = tpu.matmul %13, %14, %cst_6 {dimension_numbers = #tpu.dot_dimension_numbers<[1], [0], [0], [1], [0, 0, 1, 1], [], []>} : vector<8x384xbf16>, vector<384x128xbf16>, vector<8x128xf32> -> vector<8x128xf32>
    %cst_7 = arith.constant 0.000000e+00 : f32
    %16 = vector.broadcast %cst_7 : f32 to vector<8x128xf32>
    %17 = arith.maximumf %15, %16 : vector<8x128xf32>
    %c0_8 = arith.constant 0 : index
    %c0_9 = arith.constant 0 : index
    %18 = vector.load %arg4[%c0_8, %c0_9] : memref<136x128xbf16, #tpu.memory_space<vmem>>, vector<136x128xbf16>
    %19 = arith.truncf %17 : vector<8x128xf32> to vector<8x128xbf16>
    %20 = vector.extract_strided_slice %18 {offsets = [0, 0], sizes = [128, 128], strides = [1, 1]} : vector<136x128xbf16> to vector<128x128xbf16>
    %cst_10 = arith.constant dense<0.000000e+00> : vector<8x128xf32>
    %21 = tpu.matmul %19, %20, %cst_10 {dimension_numbers = #tpu.dot_dimension_numbers<[1], [0], [0], [1], [0, 0, 1, 1], [], []>} : vector<8x128xbf16>, vector<128x128xbf16>, vector<8x128xf32> -> vector<8x128xf32>
    %22 = vector.extract_strided_slice %18 {offsets = [128, 0], sizes = [1, 128], strides = [1, 1]} : vector<136x128xbf16> to vector<1x128xbf16>
    %23 = arith.extf %22 : vector<1x128xbf16> to vector<1x128xf32>
    %24 = vector.broadcast %23 : vector<1x128xf32> to vector<8x128xf32>
    %25 = arith.addf %21, %24 : vector<8x128xf32>
    %c0_11 = arith.constant 0 : index
    %c0_12 = arith.constant 0 : index
    %26 = vector.load %arg5[%c0_11, %c0_12] : memref<8x128xf32, #tpu.memory_space<vmem>>, vector<8x128xf32>
    tpu.vector_store %arg5[%c0_11, %c0_12], %25 {strides = array<i32>} : memref<8x128xf32, #tpu.memory_space<vmem>>, vector<8x128xf32>,
    return
  }
  func.func @transform_0(%arg0: i32) -> (i32, i32) {
    %c0_i32 = arith.constant 0 : i32
    %c0_i32_0 = arith.constant 0 : i32
    return %arg0, %c0_i32 : i32, i32
  }
  func.func @transform_1(%arg0: i32) -> (i32, i32) {
    %c0_i32 = arith.constant 0 : i32
    %c0_i32_0 = arith.constant 0 : i32
    %c0_i32_1 = arith.constant 0 : i32
    return %c0_i32, %c0_i32_0 : i32, i32
  }
  func.func @transform_2(%arg0: i32) -> (i32, i32) {
    %c0_i32 = arith.constant 0 : i32
    %c0_i32_0 = arith.constant 0 : i32
    %c0_i32_1 = arith.constant 0 : i32
    return %c0_i32, %c0_i32_0 : i32, i32
  }
  func.func @transform_3(%arg0: i32) -> (i32, i32) {
    %c0_i32 = arith.constant 0 : i32
    %c0_i32_0 = arith.constant 0 : i32
    %c0_i32_1 = arith.constant 0 : i32
    return %c0_i32, %c0_i32_0 : i32, i32
  }
  func.func @transform_4(%arg0: i32) -> (i32, i32) {
    %c0_i32 = arith.constant 0 : i32
    %c0_i32_0 = arith.constant 0 : i32
    return %arg0, %c0_i32 : i32, i32
  }
}

</mosaic_0001>

<llo_original>
// kernel: module1_forward.1
$region0: #{module1_forward.1}
  #allocation0 [shape = 'u32[]', space=smem, size = 0x4, offset = 0x4, fixed_abs, tag = 'smem constant byte address 0x4 - core index']
  #allocation1 [shape = 'u32[72,128]{1,0:T(1,128)}', space=vmem, size = 0x9000, scoped, tag = 'internal scratch']
  %s0 = inlined_call_operand.vmem [shape: f32[8,128], index: 0, kind: input, shape index: {}]
  %s1 = inlined_call_operand.hbm [shape: bf16[128,1536], index: 1, kind: input, shape index: {}]
  %s2 = inlined_call_operand.hbm [shape: bf16[384,128], index: 2, kind: input, shape index: {}]
  %s3 = inlined_call_operand.vmem [shape: bf16[136,128], index: 3, kind: input, shape index: {}]
  %s4 = inlined_call_operand.vmem [shape: f32[8,128], index: 4, kind: output, shape index: {}]
  %s5 = sld [smem:[#allocation0]]
  $region34: #{module1_forward.1} parent=0
    _
  %s7 = ssub.s32 1, %s5
  %s8 = scalar_select 0, %s7, %s5
  $region1: #{module1_forward.1} parent=0
    #allocation2 [shape = 'u8[393216]{0}', space=vmem, size = 0x60000, scoped, tag = 'input window, operand 1, single buffered']
    #allocation3 [shape = 's32[1]{0}', space=sflag, size = 0x4, scoped, tag = 'scoped memory for module1_forward.1']
    #allocation4 [shape = 'u8[98304]{0}', space=vmem, size = 0x18000, scoped, tag = 'input window, operand 2, single buffered']
    #allocation5 [shape = 's32[1]{0}', space=sflag, size = 0x4, scoped, tag = 'scoped memory for module1_forward.1']
    %9 = vsyncpa [#allocation3], 0
    %10 = vsyncpa [#allocation5], 0
    // Predicated region
    $region2: #{module1_forward.1} parent=1 // pred_check
      _
    $region3: #{module1_forward.1} parent=1 // pred_check_branch
      %12 = sbr.rel (0) target = $region5
    $region4: #{module1_forward.1} parent=1 // pred_region
      _
    $region5: #{module1_forward.1} parent=1 // pred_fallthru
      _
    // Predicated region
    $region6: #{module1_forward.1} parent=1 // pred_check
      _
    $region7: #{module1_forward.1} parent=1 // pred_check_branch
      %14 = sbr.rel (0) target = $region9
    $region8: #{module1_forward.1} parent=1 // pred_region
      %16 = vsyncadd [#allocation3], 0
      %s17 = sshll.u32 %s1, 4
      %s18 = int_to_ptr.hbm [resolvable:$true] %s17
      %s19 = sshll.u32 [#allocation2], 4
      %s20 = int_to_ptr.vmem [resolvable:$true] %s19
      %25 = dma.hbm_to_vmem [thread:$0]  %s18, 12288, %s20, [#allocation3], 768, 768, 48
    $region9: #{module1_forward.1} parent=1 // pred_fallthru
      _
    // Predicated region
    $region10: #{module1_forward.1} parent=1 // pred_check
      _
    $region11: #{module1_forward.1} parent=1 // pred_check_branch
      %27 = sbr.rel (0) target = $region13
    $region12: #{module1_forward.1} parent=1 // pred_region
      %29 = vsyncadd [#allocation5], 0
      %s30 = sshll.u32 %s2, 4
      %s31 = int_to_ptr.hbm [resolvable:$true] %s30
      %s32 = sshll.u32 [#allocation4], 4
      %s33 = int_to_ptr.vmem [resolvable:$true] %s32
      %38 = dma.hbm_to_vmem [thread:$0]  %s31, 3072, %s33, [#allocation5], 64, 64, 4
    $region13: #{module1_forward.1} parent=1 // pred_fallthru
      _
    // Predicated region
    $region14: #{module1_forward.1} parent=1 // pred_check
      _
    $region15: #{module1_forward.1} parent=1 // pred_check_branch
      %40 = sbr.rel (0) target = $region17
    $region16: #{module1_forward.1} parent=1 // pred_region
      _
    $region17: #{module1_forward.1} parent=1 // pred_fallthru
      _
    // Predicated region
    $region18: #{module1_forward.1} parent=1 // pred_check
      _
    $region19: #{module1_forward.1} parent=1 // pred_check_branch
      %42 = sbr.rel (0) target = $region21
    $region20: #{module1_forward.1} parent=1 // pred_region
      %44 = dma.done [#allocation3], 12288
    $region21: #{module1_forward.1} parent=1 // pred_fallthru
      _
    // Predicated region
    $region22: #{module1_forward.1} parent=1 // pred_check
      _
    $region23: #{module1_forward.1} parent=1 // pred_check_branch
      %46 = sbr.rel (0) target = $region25
    $region24: #{module1_forward.1} parent=1 // pred_region
      %48 = dma.done [#allocation5], 3072
    $region25: #{module1_forward.1} parent=1 // pred_fallthru
      _
    %v49 = vld [vmem:[%s0] sm:$0xff]
    %v50 = vpack.c.bf16 %v49, %v49
    %v51 = vld [vmem:[#allocation2] sm:$0xff]
    %v52 = vld [vmem:[#allocation2 + $0x8] sm:$0xff]
    %v53 = vld [vmem:[#allocation2 + $0x10] sm:$0xff]
    %v54 = vld [vmem:[#allocation2 + $0x18] sm:$0xff]
    %v55 = vld [vmem:[#allocation2 + $0x20] sm:$0xff]
    %v56 = vld [vmem:[#allocation2 + $0x28] sm:$0xff]
    %v57 = vld [vmem:[#allocation2 + $0x30] sm:$0xff]
    %v58 = vld [vmem:[#allocation2 + $0x38] sm:$0xff]
    %v59 = vld [vmem:[#allocation2 + $0x40] sm:$0xff]
    %v60 = vld [vmem:[#allocation2 + $0x48] sm:$0xff]
    %v61 = vld [vmem:[#allocation2 + $0x50] sm:$0xff]
    %v62 = vld [vmem:[#allocation2 + $0x58] sm:$0xff]
    %v63 = vld [vmem:[#allocation2 + $0x60] sm:$0xff]
    %v64 = vld [vmem:[#allocation2 + $0x68] sm:$0xff]
    %v65 = vld [vmem:[#allocation2 + $0x70] sm:$0xff]
    %v66 = vld [vmem:[#allocation2 + $0x78] sm:$0xff]
    %v67 = vld [vmem:[#allocation2 + $0x80] sm:$0xff]
    %v68 = vld [vmem:[#allocation2 + $0x88] sm:$0xff]
    %v69 = vld [vmem:[#allocation2 + $0x90] sm:$0xff]
    %v70 = vld [vmem:[#allocation2 + $0x98] sm:$0xff]
    %v71 = vld [vmem:[#allocation2 + $0xa0] sm:$0xff]
    %v72 = vld [vmem:[#allocation2 + $0xa8] sm:$0xff]
    %v73 = vld [vmem:[#allocation2 + $0xb0] sm:$0xff]
    %v74 = vld [vmem:[#allocation2 + $0xb8] sm:$0xff]
    %v75 = vld [vmem:[#allocation2 + $0xc0] sm:$0xff]
    %v76 = vld [vmem:[#allocation2 + $0xc8] sm:$0xff]
    %v77 = vld [vmem:[#allocation2 + $0xd0] sm:$0xff]
    %v78 = vld [vmem:[#allocation2 + $0xd8] sm:$0xff]
    %v79 = vld [vmem:[#allocation2 + $0xe0] sm:$0xff]
    %v80 = vld [vmem:[#allocation2 + $0xe8] sm:$0xff]
    %v81 = vld [vmem:[#allocation2 + $0xf0] sm:$0xff]
    %v82 = vld [vmem:[#allocation2 + $0xf8] sm:$0xff]
    %v83 = vld [vmem:[#allocation2 + $0x100] sm:$0xff]
    %v84 = vld [vmem:[#allocation2 + $0x108] sm:$0xff]
    %v85 = vld [vmem:[#allocation2 + $0x110] sm:$0xff]
    %v86 = vld [vmem:[#allocation2 + $0x118] sm:$0xff]
    %v87 = vld [vmem:[#allocation2 + $0x120] sm:$0xff]
    %v88 = vld [vmem:[#allocation2 + $0x128] sm:$0xff]
    %v89 = vld [vmem:[#allocation2 + $0x130] sm:$0xff]
    %v90 = vld [vmem:[#allocation2 + $0x138] sm:$0xff]
    %v91 = vld [vmem:[#allocation2 + $0x140] sm:$0xff]
    %v92 = vld [vmem:[#allocation2 + $0x148] sm:$0xff]
    %v93 = vld [vmem:[#allocation2 + $0x150] sm:$0xff]
    %v94 = vld [vmem:[#allocation2 + $0x158] sm:$0xff]
    %v95 = vld [vmem:[#allocation2 + $0x160] sm:$0xff]
    %v96 = vld [vmem:[#allocation2 + $0x168] sm:$0xff]
    %v97 = vld [vmem:[#allocation2 + $0x170] sm:$0xff]
    %v98 = vld [vmem:[#allocation2 + $0x178] sm:$0xff]
    %v99 = vld [vmem:[#allocation2 + $0x180] sm:$0xff]
    %v100 = vld [vmem:[#allocation2 + $0x188] sm:$0xff]
    %v101 = vld [vmem:[#allocation2 + $0x190] sm:$0xff]
    %v102 = vld [vmem:[#allocation2 + $0x198] sm:$0xff]
    %v103 = vld [vmem:[#allocation2 + $0x1a0] sm:$0xff]
    %v104 = vld [vmem:[#allocation2 + $0x1a8] sm:$0xff]
    %v105 = vld [vmem:[#allocation2 + $0x1b0] sm:$0xff]
    %v106 = vld [vmem:[#allocation2 + $0x1b8] sm:$0xff]
    %v107 = vld [vmem:[#allocation2 + $0x1c0] sm:$0xff]
    %v108 = vld [vmem:[#allocation2 + $0x1c8] sm:$0xff]
    %v109 = vld [vmem:[#allocation2 + $0x1d0] sm:$0xff]
    %v110 = vld [vmem:[#allocation2 + $0x1d8] sm:$0xff]
    %v111 = vld [vmem:[#allocation2 + $0x1e0] sm:$0xff]
    %v112 = vld [vmem:[#allocation2 + $0x1e8] sm:$0xff]
    %v113 = vld [vmem:[#allocation2 + $0x1f0] sm:$0xff]
    %v114 = vld [vmem:[#allocation2 + $0x1f8] sm:$0xff]
    %v115 = vld [vmem:[#allocation2 + $0x200] sm:$0xff]
    %v116 = vld [vmem:[#allocation2 + $0x208] sm:$0xff]
    %v117 = vld [vmem:[#allocation2 + $0x210] sm:$0xff]
    %v118 = vld [vmem:[#allocation2 + $0x218] sm:$0xff]
    %v119 = vld [vmem:[#allocation2 + $0x220] sm:$0xff]
    %v120 = vld [vmem:[#allocation2 + $0x228] sm:$0xff]
    %v121 = vld [vmem:[#allocation2 + $0x230] sm:$0xff]
    %v122 = vld [vmem:[#allocation2 + $0x238] sm:$0xff]
    %v123 = vld [vmem:[#allocation2 + $0x240] sm:$0xff]
    %v124 = vld [vmem:[#allocation2 + $0x248] sm:$0xff]
    %v125 = vld [vmem:[#allocation2 + $0x250] sm:$0xff]
    %v126 = vld [vmem:[#allocation2 + $0x258] sm:$0xff]
    %v127 = vld [vmem:[#allocation2 + $0x260] sm:$0xff]
    %v128 = vld [vmem:[#allocation2 + $0x268] sm:$0xff]
    %v129 = vld [vmem:[#allocation2 + $0x270] sm:$0xff]
    %v130 = vld [vmem:[#allocation2 + $0x278] sm:$0xff]
    %v131 = vld [vmem:[#allocation2 + $0x280] sm:$0xff]
    %v132 = vld [vmem:[#allocation2 + $0x288] sm:$0xff]
    %v133 = vld [vmem:[#allocation2 + $0x290] sm:$0xff]
    %v134 = vld [vmem:[#allocation2 + $0x298] sm:$0xff]
    %v135 = vld [vmem:[#allocation2 + $0x2a0] sm:$0xff]
    %v136 = vld [vmem:[#allocation2 + $0x2a8] sm:$0xff]
    %v137 = vld [vmem:[#allocation2 + $0x2b0] sm:$0xff]
    %v138 = vld [vmem:[#allocation2 + $0x2b8] sm:$0xff]
    %v139 = vld [vmem:[#allocation2 + $0x2c0] sm:$0xff]
    %v140 = vld [vmem:[#allocation2 + $0x2c8] sm:$0xff]
    %v141 = vld [vmem:[#allocation2 + $0x2d0] sm:$0xff]
    %v142 = vld [vmem:[#allocation2 + $0x2d8] sm:$0xff]
    %v143 = vld [vmem:[#allocation2 + $0x2e0] sm:$0xff]
    %v144 = vld [vmem:[#allocation2 + $0x2e8] sm:$0xff]
    %v145 = vld [vmem:[#allocation2 + $0x2f0] sm:$0xff]
    %v146 = vld [vmem:[#allocation2 + $0x2f8] sm:$0xff]
    %v243 = vunpack.c.l.b16 %v51
    %v244 = vunpack.c.h.b16 %v51
    %v245 = vunpack.c.l.b16 %v52
    %v246 = vunpack.c.h.b16 %v52
    %v247 = vunpack.c.l.b16 %v53
    %v248 = vunpack.c.h.b16 %v53
    %v249 = vunpack.c.l.b16 %v54
    %v250 = vunpack.c.h.b16 %v54
    %v251 = vunpack.c.l.b16 %v55
    %v252 = vunpack.c.h.b16 %v55
    %v253 = vunpack.c.l.b16 %v56
    %v254 = vunpack.c.h.b16 %v56
    %v255 = vunpack.c.l.b16 %v57
    %v256 = vunpack.c.h.b16 %v57
    %v257 = vunpack.c.l.b16 %v58
    %v258 = vunpack.c.h.b16 %v58
    %v259 = vunpack.c.l.b16 %v59
    %v260 = vunpack.c.h.b16 %v59
    %v261 = vunpack.c.l.b16 %v60
    %v262 = vunpack.c.h.b16 %v60
    %v263 = vunpack.c.l.b16 %v61
    %v264 = vunpack.c.h.b16 %v61
    %v265 = vunpack.c.l.b16 %v62
    %v266 = vunpack.c.h.b16 %v62
    %v267 = vunpack.c.l.b16 %v63
    %v268 = vunpack.c.h.b16 %v63
    %v269 = vunpack.c.l.b16 %v64
    %v270 = vunpack.c.h.b16 %v64
    %v271 = vunpack.c.l.b16 %v65
    %v272 = vunpack.c.h.b16 %v65
    %v273 = vunpack.c.l.b16 %v66
    %v274 = vunpack.c.h.b16 %v66
    %v275 = vunpack.c.l.b16 %v67
    %v276 = vunpack.c.h.b16 %v67
    %v277 = vunpack.c.l.b16 %v68
    %v278 = vunpack.c.h.b16 %v68
    %v279 = vunpack.c.l.b16 %v69
    %v280 = vunpack.c.h.b16 %v69
    %v281 = vunpack.c.l.b16 %v70
    %v282 = vunpack.c.h.b16 %v70
    %v283 = vunpack.c.l.b16 %v71
    %v284 = vunpack.c.h.b16 %v71
    %v285 = vunpack.c.l.b16 %v72
    %v286 = vunpack.c.h.b16 %v72
    %v287 = vunpack.c.l.b16 %v73
    %v288 = vunpack.c.h.b16 %v73
    %v289 = vunpack.c.l.b16 %v74
    %v290 = vunpack.c.h.b16 %v74
    %v291 = vunpack.c.l.b16 %v75
    %v292 = vunpack.c.h.b16 %v75
    %v293 = vunpack.c.l.b16 %v76
    %v294 = vunpack.c.h.b16 %v76
    %v295 = vunpack.c.l.b16 %v77
    %v296 = vunpack.c.h.b16 %v77
    %v297 = vunpack.c.l.b16 %v78
    %v298 = vunpack.c.h.b16 %v78
    %v299 = vunpack.c.l.b16 %v79
    %v300 = vunpack.c.h.b16 %v79
    %v301 = vunpack.c.l.b16 %v80
    %v302 = vunpack.c.h.b16 %v80
    %v303 = vunpack.c.l.b16 %v81
    %v304 = vunpack.c.h.b16 %v81
    %v305 = vunpack.c.l.b16 %v82
    %v306 = vunpack.c.h.b16 %v82
    %v307 = vunpack.c.l.b16 %v83
    %v308 = vunpack.c.h.b16 %v83
    %v309 = vunpack.c.l.b16 %v84
    %v310 = vunpack.c.h.b16 %v84
    %v311 = vunpack.c.l.b16 %v85
    %v312 = vunpack.c.h.b16 %v85
    %v313 = vunpack.c.l.b16 %v86
    %v314 = vunpack.c.h.b16 %v86
    %v315 = vunpack.c.l.b16 %v87
    %v316 = vunpack.c.h.b16 %v87
    %v317 = vunpack.c.l.b16 %v88
    %v318 = vunpack.c.h.b16 %v88
    %v319 = vunpack.c.l.b16 %v89
    %v320 = vunpack.c.h.b16 %v89
    %v321 = vunpack.c.l.b16 %v90
    %v322 = vunpack.c.h.b16 %v90
    %v323 = vunpack.c.l.b16 %v91
    %v324 = vunpack.c.h.b16 %v91
    %v325 = vunpack.c.l.b16 %v92
    %v326 = vunpack.c.h.b16 %v92
    %v327 = vunpack.c.l.b16 %v93
    %v328 = vunpack.c.h.b16 %v93
    %v329 = vunpack.c.l.b16 %v94
    %v330 = vunpack.c.h.b16 %v94
    %v331 = vunpack.c.l.b16 %v95
    %v332 = vunpack.c.h.b16 %v95
    %v333 = vunpack.c.l.b16 %v96
    %v334 = vunpack.c.h.b16 %v96
    %v335 = vunpack.c.l.b16 %v97
    %v336 = vunpack.c.h.b16 %v97
    %v337 = vunpack.c.l.b16 %v98
    %v338 = vunpack.c.h.b16 %v98
    %v339 = vunpack.c.l.b16 %v99
    %v340 = vunpack.c.h.b16 %v99
    %v341 = vunpack.c.l.b16 %v100
    %v342 = vunpack.c.h.b16 %v100
    %v343 = vunpack.c.l.b16 %v101
    %v344 = vunpack.c.h.b16 %v101
    %v345 = vunpack.c.l.b16 %v102
    %v346 = vunpack.c.h.b16 %v102
    %v347 = vunpack.c.l.b16 %v103
    %v348 = vunpack.c.h.b16 %v103
    %v349 = vunpack.c.l.b16 %v104
    %v350 = vunpack.c.h.b16 %v104
    %v351 = vunpack.c.l.b16 %v105
    %v352 = vunpack.c.h.b16 %v105
    %v353 = vunpack.c.l.b16 %v106
    %v354 = vunpack.c.h.b16 %v106
    %v355 = vunpack.c.l.b16 %v107
    %v356 = vunpack.c.h.b16 %v107
    %v357 = vunpack.c.l.b16 %v108
    %v358 = vunpack.c.h.b16 %v108
    %v359 = vunpack.c.l.b16 %v109
    %v360 = vunpack.c.h.b16 %v109
    %v361 = vunpack.c.l.b16 %v110
    %v362 = vunpack.c.h.b16 %v110
    %v363 = vunpack.c.l.b16 %v111
    %v364 = vunpack.c.h.b16 %v111
    %v365 = vunpack.c.l.b16 %v112
    %v366 = vunpack.c.h.b16 %v112
    %v367 = vunpack.c.l.b16 %v113
    %v368 = vunpack.c.h.b16 %v113
    %v369 = vunpack.c.l.b16 %v114
    %v370 = vunpack.c.h.b16 %v114
    %v371 = vunpack.c.l.b16 %v115
    %v372 = vunpack.c.h.b16 %v115
    %v373 = vunpack.c.l.b16 %v116
    %v374 = vunpack.c.h.b16 %v116
    %v375 = vunpack.c.l.b16 %v117
    %v376 = vunpack.c.h.b16 %v117
    %v377 = vunpack.c.l.b16 %v118
    %v378 = vunpack.c.h.b16 %v118
    %v379 = vunpack.c.l.b16 %v119
    %v380 = vunpack.c.h.b16 %v119
    %v381 = vunpack.c.l.b16 %v120
    %v382 = vunpack.c.h.b16 %v120
    %v383 = vunpack.c.l.b16 %v121
    %v384 = vunpack.c.h.b16 %v121
    %v385 = vunpack.c.l.b16 %v122
    %v386 = vunpack.c.h.b16 %v122
    %v387 = vunpack.c.l.b16 %v123
    %v388 = vunpack.c.h.b16 %v123
    %v389 = vunpack.c.l.b16 %v124
    %v390 = vunpack.c.h.b16 %v124
    %v391 = vunpack.c.l.b16 %v125
    %v392 = vunpack.c.h.b16 %v125
    %v393 = vunpack.c.l.b16 %v126
    %v394 = vunpack.c.h.b16 %v126
    %v395 = vunpack.c.l.b16 %v127
    %v396 = vunpack.c.h.b16 %v127
    %v397 = vunpack.c.l.b16 %v128
    %v398 = vunpack.c.h.b16 %v128
    %v399 = vunpack.c.l.b16 %v129
    %v400 = vunpack.c.h.b16 %v129
    %v401 = vunpack.c.l.b16 %v130
    %v402 = vunpack.c.h.b16 %v130
    %v403 = vunpack.c.l.b16 %v131
    %v404 = vunpack.c.h.b16 %v131
    %v405 = vunpack.c.l.b16 %v132
    %v406 = vunpack.c.h.b16 %v132
    %v407 = vunpack.c.l.b16 %v133
    %v408 = vunpack.c.h.b16 %v133
    %v409 = vunpack.c.l.b16 %v134
    %v410 = vunpack.c.h.b16 %v134
    %v411 = vunpack.c.l.b16 %v135
    %v412 = vunpack.c.h.b16 %v135
    %v413 = vunpack.c.l.b16 %v136
    %v414 = vunpack.c.h.b16 %v136
    %v415 = vunpack.c.l.b16 %v137
    %v416 = vunpack.c.h.b16 %v137
    %v417 = vunpack.c.l.b16 %v138
    %v418 = vunpack.c.h.b16 %v138
    %v419 = vunpack.c.l.b16 %v139
    %v420 = vunpack.c.h.b16 %v139
    %v421 = vunpack.c.l.b16 %v140
    %v422 = vunpack.c.h.b16 %v140
    %v423 = vunpack.c.l.b16 %v141
    %v424 = vunpack.c.h.b16 %v141
    %v425 = vunpack.c.l.b16 %v142
    %v426 = vunpack.c.h.b16 %v142
    %v427 = vunpack.c.l.b16 %v143
    %v428 = vunpack.c.h.b16 %v143
    %v429 = vunpack.c.l.b16 %v144
    %v430 = vunpack.c.h.b16 %v144
    %v431 = vunpack.c.l.b16 %v145
    %v432 = vunpack.c.h.b16 %v145
    %v433 = vunpack.c.l.b16 %v146
    %v434 = vunpack.c.h.b16 %v146
    %v435 = vpack.c.b16 %v255, %v243
    %v436 = vpack.c.b16 %v256, %v244
    %v437 = vpack.c.b16 %v257, %v245
    %v438 = vpack.c.b16 %v258, %v246
    %v439 = vpack.c.b16 %v259, %v247
    %v440 = vpack.c.b16 %v260, %v248
    %v441 = vpack.c.b16 %v261, %v249
    %v442 = vpack.c.b16 %v262, %v250
    %v443 = vpack.c.b16 %v263, %v251
    %v444 = vpack.c.b16 %v264, %v252
    %v445 = vpack.c.b16 %v265, %v253
    %v446 = vpack.c.b16 %v266, %v254
    %v447 = vpack.c.b16 %v279, %v267
    %v448 = vpack.c.b16 %v280, %v268
    %v449 = vpack.c.b16 %v281, %v269
    %v450 = vpack.c.b16 %v282, %v270
    %v451 = vpack.c.b16 %v283, %v271
    %v452 = vpack.c.b16 %v284, %v272
    %v453 = vpack.c.b16 %v285, %v273
    %v454 = vpack.c.b16 %v286, %v274
    %v455 = vpack.c.b16 %v287, %v275
    %v456 = vpack.c.b16 %v288, %v276
    %v457 = vpack.c.b16 %v289, %v277
    %v458 = vpack.c.b16 %v290, %v278
    %v459 = vpack.c.b16 %v303, %v291
    %v460 = vpack.c.b16 %v304, %v292
    %v461 = vpack.c.b16 %v305, %v293
    %v462 = vpack.c.b16 %v306, %v294
    %v463 = vpack.c.b16 %v307, %v295
    %v464 = vpack.c.b16 %v308, %v296
    %v465 = vpack.c.b16 %v309, %v297
    %v466 = vpack.c.b16 %v310, %v298
    %v467 = vpack.c.b16 %v311, %v299
    %v468 = vpack.c.b16 %v312, %v300
    %v469 = vpack.c.b16 %v313, %v301
    %v470 = vpack.c.b16 %v314, %v302
    %v471 = vpack.c.b16 %v327, %v315
    %v472 = vpack.c.b16 %v328, %v316
    %v473 = vpack.c.b16 %v329, %v317
    %v474 = vpack.c.b16 %v330, %v318
    %v475 = vpack.c.b16 %v331, %v319
    %v476 = vpack.c.b16 %v332, %v320
    %v477 = vpack.c.b16 %v333, %v321
    %v478 = vpack.c.b16 %v334, %v322
    %v479 = vpack.c.b16 %v335, %v323
    %v480 = vpack.c.b16 %v336, %v324
    %v481 = vpack.c.b16 %v337, %v325
    %v482 = vpack.c.b16 %v338, %v326
    %v483 = vpack.c.b16 %v351, %v339
    %v484 = vpack.c.b16 %v352, %v340
    %v485 = vpack.c.b16 %v353, %v341
    %v486 = vpack.c.b16 %v354, %v342
    %v487 = vpack.c.b16 %v355, %v343
    %v488 = vpack.c.b16 %v356, %v344
    %v489 = vpack.c.b16 %v357, %v345
    %v490 = vpack.c.b16 %v358, %v346
    %v491 = vpack.c.b16 %v359, %v347
    %v492 = vpack.c.b16 %v360, %v348
    %v493 = vpack.c.b16 %v361, %v349
    %v494 = vpack.c.b16 %v362, %v350
    %v495 = vpack.c.b16 %v375, %v363
    %v496 = vpack.c.b16 %v376, %v364
    %v497 = vpack.c.b16 %v377, %v365
    %v498 = vpack.c.b16 %v378, %v366
    %v499 = vpack.c.b16 %v379, %v367
    %v500 = vpack.c.b16 %v380, %v368
    %v501 = vpack.c.b16 %v381, %v369
    %v502 = vpack.c.b16 %v382, %v370
    %v503 = vpack.c.b16 %v383, %v371
    %v504 = vpack.c.b16 %v384, %v372
    %v505 = vpack.c.b16 %v385, %v373
    %v506 = vpack.c.b16 %v386, %v374
    %v507 = vpack.c.b16 %v399, %v387
    %v508 = vpack.c.b16 %v400, %v388
    %v509 = vpack.c.b16 %v401, %v389
    %v510 = vpack.c.b16 %v402, %v390
    %v511 = vpack.c.b16 %v403, %v391
    %v512 = vpack.c.b16 %v404, %v392
    %v513 = vpack.c.b16 %v405, %v393
    %v514 = vpack.c.b16 %v406, %v394
    %v515 = vpack.c.b16 %v407, %v395
    %v516 = vpack.c.b16 %v408, %v396
    %v517 = vpack.c.b16 %v409, %v397
    %v518 = vpack.c.b16 %v410, %v398
    %v519 = vpack.c.b16 %v423, %v411
    %v520 = vpack.c.b16 %v424, %v412
    %v521 = vpack.c.b16 %v425, %v413
    %v522 = vpack.c.b16 %v426, %v414
    %v523 = vpack.c.b16 %v427, %v415
    %v524 = vpack.c.b16 %v428, %v416
    %v525 = vpack.c.b16 %v429, %v417
    %v526 = vpack.c.b16 %v430, %v418
    %v527 = vpack.c.b16 %v431, %v419
    %v528 = vpack.c.b16 %v432, %v420
    %v529 = vpack.c.b16 %v433, %v421
    %v530 = vpack.c.b16 %v434, %v422
    %627 = vmatpush.bf16.msra.mxu0 %v519
    %628 = vmatpush.bf16.msra.mxu0 %v507
    %629 = vmatpush.bf16.msra.mxu0 %v495
    %630 = vmatpush.bf16.msra.mxu0 %v483
    %631 = vmatpush.bf16.msra.mxu0 %v471
    %632 = vmatpush.bf16.msra.mxu0 %v459
    %633 = vmatpush.bf16.msra.mxu0 %v447
    %634 = vmatpush.bf16.msra.mxu0 %v435
    %635 = vmatmul.bf16.gmra.mxu0 %v50
    %v636 = vpop.f32.mrf.mxu0
    %v637 = vadd.f32 0.0, %v636
    %v638 = vpop.f32.mrf.mxu0
    %639 = vdwg.mxu0
    %640 = vmatpush.bf16.msra.mxu0 %v520
    %641 = vmatpush.bf16.msra.mxu0 %v508
    %642 = vmatpush.bf16.msra.mxu0 %v496
    %643 = vmatpush.bf16.msra.mxu0 %v484
    %644 = vmatpush.bf16.msra.mxu0 %v472
    %645 = vmatpush.bf16.msra.mxu0 %v460
    %646 = vmatpush.bf16.msra.mxu0 %v448
    %647 = vmatpush.bf16.msra.mxu0 %v436
    %648 = vmatmul.bf16.gmra.mxu0 %v50
    %v649 = vpop.f32.mrf.mxu0
    %v650 = vadd.f32 0.0, %v649
    %v651 = vpop.f32.mrf.mxu0
    %652 = vdwg.mxu0
    %653 = vmatpush.bf16.msra.mxu0 %v521
    %654 = vmatpush.bf16.msra.mxu0 %v509
    %655 = vmatpush.bf16.msra.mxu0 %v497
    %656 = vmatpush.bf16.msra.mxu0 %v485
    %657 = vmatpush.bf16.msra.mxu0 %v473
    %658 = vmatpush.bf16.msra.mxu0 %v461
    %659 = vmatpush.bf16.msra.mxu0 %v449
    %660 = vmatpush.bf16.msra.mxu0 %v437
    %661 = vmatmul.bf16.gmra.mxu0 %v50
    %v662 = vpop.f32.mrf.mxu0
    %v663 = vadd.f32 0.0, %v662
    %v664 = vpop.f32.mrf.mxu0
    %665 = vdwg.mxu0
    %666 = vmatpush.bf16.msra.mxu0 %v522
    %667 = vmatpush.bf16.msra.mxu0 %v510
    %668 = vmatpush.bf16.msra.mxu0 %v498
    %669 = vmatpush.bf16.msra.mxu0 %v486
    %670 = vmatpush.bf16.msra.mxu0 %v474
    %671 = vmatpush.bf16.msra.mxu0 %v462
    %672 = vmatpush.bf16.msra.mxu0 %v450
    %673 = vmatpush.bf16.msra.mxu0 %v438
    %674 = vmatmul.bf16.gmra.mxu0 %v50
    %v675 = vpop.f32.mrf.mxu0
    %v676 = vadd.f32 0.0, %v675
    %v677 = vpop.f32.mrf.mxu0
    %678 = vdwg.mxu0
    %679 = vmatpush.bf16.msra.mxu0 %v523
    %680 = vmatpush.bf16.msra.mxu0 %v511
    %681 = vmatpush.bf16.msra.mxu0 %v499
    %682 = vmatpush.bf16.msra.mxu0 %v487
    %683 = vmatpush.bf16.msra.mxu0 %v475
    %684 = vmatpush.bf16.msra.mxu0 %v463
    %685 = vmatpush.bf16.msra.mxu0 %v451
    %686 = vmatpush.bf16.msra.mxu0 %v439
    %687 = vmatmul.bf16.gmra.mxu0 %v50
    %v688 = vpop.f32.mrf.mxu0
    %v689 = vadd.f32 0.0, %v688
    %v690 = vpop.f32.mrf.mxu0
    %691 = vdwg.mxu0
    %692 = vmatpush.bf16.msra.mxu0 %v524
    %693 = vmatpush.bf16.msra.mxu0 %v512
    %694 = vmatpush.bf16.msra.mxu0 %v500
    %695 = vmatpush.bf16.msra.mxu0 %v488
    %696 = vmatpush.bf16.msra.mxu0 %v476
    %697 = vmatpush.bf16.msra.mxu0 %v464
    %698 = vmatpush.bf16.msra.mxu0 %v452
    %699 = vmatpush.bf16.msra.mxu0 %v440
    %700 = vmatmul.bf16.gmra.mxu0 %v50
    %v701 = vpop.f32.mrf.mxu0
    %v702 = vadd.f32 0.0, %v701
    %v703 = vpop.f32.mrf.mxu0
    %704 = vdwg.mxu0
    %705 = vmatpush.bf16.msra.mxu0 %v525
    %706 = vmatpush.bf16.msra.mxu0 %v513
    %707 = vmatpush.bf16.msra.mxu0 %v501
    %708 = vmatpush.bf16.msra.mxu0 %v489
    %709 = vmatpush.bf16.msra.mxu0 %v477
    %710 = vmatpush.bf16.msra.mxu0 %v465
    %711 = vmatpush.bf16.msra.mxu0 %v453
    %712 = vmatpush.bf16.msra.mxu0 %v441
    %713 = vmatmul.bf16.gmra.mxu0 %v50
    %v714 = vpop.f32.mrf.mxu0
    %v715 = vadd.f32 0.0, %v714
    %v716 = vpop.f32.mrf.mxu0
    %717 = vdwg.mxu0
    %718 = vmatpush.bf16.msra.mxu0 %v526
    %719 = vmatpush.bf16.msra.mxu0 %v514
    %720 = vmatpush.bf16.msra.mxu0 %v502
    %721 = vmatpush.bf16.msra.mxu0 %v490
    %722 = vmatpush.bf16.msra.mxu0 %v478
    %723 = vmatpush.bf16.msra.mxu0 %v466
    %724 = vmatpush.bf16.msra.mxu0 %v454
    %725 = vmatpush.bf16.msra.mxu0 %v442
    %726 = vmatmul.bf16.gmra.mxu0 %v50
    %v727 = vpop.f32.mrf.mxu0
    %v728 = vadd.f32 0.0, %v727
    %v729 = vpop.f32.mrf.mxu0
    %730 = vdwg.mxu0
    %731 = vmatpush.bf16.msra.mxu0 %v527
    %732 = vmatpush.bf16.msra.mxu0 %v515
    %733 = vmatpush.bf16.msra.mxu0 %v503
    %734 = vmatpush.bf16.msra.mxu0 %v491
    %735 = vmatpush.bf16.msra.mxu0 %v479
    %736 = vmatpush.bf16.msra.mxu0 %v467
    %737 = vmatpush.bf16.msra.mxu0 %v455
    %738 = vmatpush.bf16.msra.mxu0 %v443
    %739 = vmatmul.bf16.gmra.mxu0 %v50
    %v740 = vpop.f32.mrf.mxu0
    %v741 = vadd.f32 0.0, %v740
    %v742 = vpop.f32.mrf.mxu0
    %743 = vdwg.mxu0
    %744 = vmatpush.bf16.msra.mxu0 %v528
    %745 = vmatpush.bf16.msra.mxu0 %v516
    %746 = vmatpush.bf16.msra.mxu0 %v504
    %747 = vmatpush.bf16.msra.mxu0 %v492
    %748 = vmatpush.bf16.msra.mxu0 %v480
    %749 = vmatpush.bf16.msra.mxu0 %v468
    %750 = vmatpush.bf16.msra.mxu0 %v456
    %751 = vmatpush.bf16.msra.mxu0 %v444
    %752 = vmatmul.bf16.gmra.mxu0 %v50
    %v753 = vpop.f32.mrf.mxu0
    %v754 = vadd.f32 0.0, %v753
    %v755 = vpop.f32.mrf.mxu0
    %756 = vdwg.mxu0
    %757 = vmatpush.bf16.msra.mxu0 %v529
    %758 = vmatpush.bf16.msra.mxu0 %v517
    %759 = vmatpush.bf16.msra.mxu0 %v505
    %760 = vmatpush.bf16.msra.mxu0 %v493
    %761 = vmatpush.bf16.msra.mxu0 %v481
    %762 = vmatpush.bf16.msra.mxu0 %v469
    %763 = vmatpush.bf16.msra.mxu0 %v457
    %764 = vmatpush.bf16.msra.mxu0 %v445
    %765 = vmatmul.bf16.gmra.mxu0 %v50
    %v766 = vpop.f32.mrf.mxu0
    %v767 = vadd.f32 0.0, %v766
    %v768 = vpop.f32.mrf.mxu0
    %769 = vdwg.mxu0
    %770 = vmatpush.bf16.msra.mxu0 %v530
    %771 = vmatpush.bf16.msra.mxu0 %v518
    %772 = vmatpush.bf16.msra.mxu0 %v506
    %773 = vmatpush.bf16.msra.mxu0 %v494
    %774 = vmatpush.bf16.msra.mxu0 %v482
    %775 = vmatpush.bf16.msra.mxu0 %v470
    %776 = vmatpush.bf16.msra.mxu0 %v458
    %777 = vmatpush.bf16.msra.mxu0 %v446
    %778 = vmatmul.bf16.gmra.mxu0 %v50
    %v779 = vpop.f32.mrf.mxu0
    %v780 = vadd.f32 0.0, %v779
    %v781 = vpop.f32.mrf.mxu0
    %782 = vdwg.mxu0
    %v783 = vmax.f32 %v637, 0.0
    %v784 = vmax.f32 %v650, 0.0
    %v785 = vmax.f32 %v663, 0.0
    %v786 = vmax.f32 %v676, 0.0
    %v787 = vmax.f32 %v689, 0.0
    %v788 = vmax.f32 %v702, 0.0
    %v789 = vmax.f32 %v715, 0.0
    %v790 = vmax.f32 %v728, 0.0
    %v791 = vmax.f32 %v741, 0.0
    %v792 = vmax.f32 %v754, 0.0
    %v793 = vmax.f32 %v767, 0.0
    %v794 = vmax.f32 %v780, 0.0
    %v795 = vmax.f32 %v783, %v786
    %v796 = vmax.f32 %v784, %v787
    %v797 = vmax.f32 %v785, %v788
    %v798 = vmax.f32 %v789, %v792
    %v799 = vmax.f32 %v790, %v793
    %v800 = vmax.f32 %v791, %v794
    %v801 = vmax.f32 %v795, %v798
    %v802 = vmax.f32 %v796, %v799
    %v803 = vmax.f32 %v797, %v800
    %v804 = vpack.c.bf16 %v801, %v801
    %v805 = vpack.c.bf16 %v802, %v802
    %v806 = vpack.c.bf16 %v803, %v803
    %v807 = vld [vmem:[#allocation4] sm:$0xf]
    %v808 = vld [vmem:[#allocation4 + $0x4] sm:$0xf]
    %v809 = vld [vmem:[#allocation4 + $0x8] sm:$0xf]
    %v810 = vld [vmem:[#allocation4 + $0xc] sm:$0xf]
    %v811 = vld [vmem:[#allocation4 + $0x10] sm:$0xf]
    %v812 = vld [vmem:[#allocation4 + $0x14] sm:$0xf]
    %v813 = vld [vmem:[#allocation4 + $0x18] sm:$0xf]
    %v814 = vld [vmem:[#allocation4 + $0x1c] sm:$0xf]
    %v815 = vld [vmem:[#allocation4 + $0x20] sm:$0xf]
    %v816 = vld [vmem:[#allocation4 + $0x24] sm:$0xf]
    %v817 = vld [vmem:[#allocation4 + $0x28] sm:$0xf]
    %v818 = vld [vmem:[#allocation4 + $0x2c] sm:$0xf]
    %v819 = vld [vmem:[#allocation4 + $0x30] sm:$0xf]
    %v820 = vld [vmem:[#allocation4 + $0x34] sm:$0xf]
    %v821 = vld [vmem:[#allocation4 + $0x38] sm:$0xf]
    %v822 = vld [vmem:[#allocation4 + $0x3c] sm:$0xf]
    %v823 = vld [vmem:[#allocation4 + $0x40] sm:$0xf]
    %v824 = vld [vmem:[#allocation4 + $0x44] sm:$0xf]
    %v825 = vld [vmem:[#allocation4 + $0x48] sm:$0xf]
    %v826 = vld [vmem:[#allocation4 + $0x4c] sm:$0xf]
    %v827 = vld [vmem:[#allocation4 + $0x50] sm:$0xf]
    %v828 = vld [vmem:[#allocation4 + $0x54] sm:$0xf]
    %v829 = vld [vmem:[#allocation4 + $0x58] sm:$0xf]
    %v830 = vld [vmem:[#allocation4 + $0x5c] sm:$0xf]
    %v831 = vld [vmem:[#allocation4 + $0x60] sm:$0xf]
    %v832 = vld [vmem:[#allocation4 + $0x64] sm:$0xf]
    %v833 = vld [vmem:[#allocation4 + $0x68] sm:$0xf]
    %v834 = vld [vmem:[#allocation4 + $0x6c] sm:$0xf]
    %v835 = vld [vmem:[#allocation4 + $0x70] sm:$0xf]
    %v836 = vld [vmem:[#allocation4 + $0x74] sm:$0xf]
    %v837 = vld [vmem:[#allocation4 + $0x78] sm:$0xf]
    %v838 = vld [vmem:[#allocation4 + $0x7c] sm:$0xf]
    %v839 = vld [vmem:[#allocation4 + $0x80] sm:$0xf]
    %v840 = vld [vmem:[#allocation4 + $0x84] sm:$0xf]
    %v841 = vld [vmem:[#allocation4 + $0x88] sm:$0xf]
    %v842 = vld [vmem:[#allocation4 + $0x8c] sm:$0xf]
    %v843 = vld [vmem:[#allocation4 + $0x90] sm:$0xf]
    %v844 = vld [vmem:[#allocation4 + $0x94] sm:$0xf]
    %v845 = vld [vmem:[#allocation4 + $0x98] sm:$0xf]
    %v846 = vld [vmem:[#allocation4 + $0x9c] sm:$0xf]
    %v847 = vld [vmem:[#allocation4 + $0xa0] sm:$0xf]
    %v848 = vld [vmem:[#allocation4 + $0xa4] sm:$0xf]
    %v849 = vld [vmem:[#allocation4 + $0xa8] sm:$0xf]
    %v850 = vld [vmem:[#allocation4 + $0xac] sm:$0xf]
    %v851 = vld [vmem:[#allocation4 + $0xb0] sm:$0xf]
    %v852 = vld [vmem:[#allocation4 + $0xb4] sm:$0xf]
    %v853 = vld [vmem:[#allocation4 + $0xb8] sm:$0xf]
    %v854 = vld [vmem:[#allocation4 + $0xbc] sm:$0xf]
    %v903 = vunpack.c.l.b16 %v807
    %v904 = vunpack.c.l.b16 %v808
    %v905 = vunpack.c.l.b16 %v809
    %v906 = vunpack.c.l.b16 %v810
    %v907 = vunpack.c.l.b16 %v811
    %v908 = vunpack.c.l.b16 %v812
    %v909 = vunpack.c.l.b16 %v813
    %v910 = vunpack.c.l.b16 %v814
    %v911 = vunpack.c.l.b16 %v815
    %v912 = vunpack.c.l.b16 %v816
    %v913 = vunpack.c.l.b16 %v817
    %v914 = vunpack.c.l.b16 %v818
    %v915 = vunpack.c.l.b16 %v819
    %v916 = vunpack.c.l.b16 %v820
    %v917 = vunpack.c.l.b16 %v821
    %v918 = vunpack.c.l.b16 %v822
    %v919 = vunpack.c.l.b16 %v823
    %v920 = vunpack.c.l.b16 %v824
    %v921 = vunpack.c.l.b16 %v825
    %v922 = vunpack.c.l.b16 %v826
    %v923 = vunpack.c.l.b16 %v827
    %v924 = vunpack.c.l.b16 %v828
    %v925 = vunpack.c.l.b16 %v829
    %v926 = vunpack.c.l.b16 %v830
    %v927 = vunpack.c.l.b16 %v831
    %v928 = vunpack.c.l.b16 %v832
    %v929 = vunpack.c.l.b16 %v833
    %v930 = vunpack.c.l.b16 %v834
    %v931 = vunpack.c.l.b16 %v835
    %v932 = vunpack.c.l.b16 %v836
    %v933 = vunpack.c.l.b16 %v837
    %v934 = vunpack.c.l.b16 %v838
    %v935 = vunpack.c.l.b16 %v839
    %v936 = vunpack.c.l.b16 %v840
    %v937 = vunpack.c.l.b16 %v841
    %v938 = vunpack.c.l.b16 %v842
    %v939 = vunpack.c.l.b16 %v843
    %v940 = vunpack.c.l.b16 %v844
    %v941 = vunpack.c.l.b16 %v845
    %v942 = vunpack.c.l.b16 %v846
    %v943 = vunpack.c.l.b16 %v847
    %v944 = vunpack.c.l.b16 %v848
    %v945 = vunpack.c.l.b16 %v849
    %v946 = vunpack.c.l.b16 %v850
    %v947 = vunpack.c.l.b16 %v851
    %v948 = vunpack.c.l.b16 %v852
    %v949 = vunpack.c.l.b16 %v853
    %v950 = vunpack.c.l.b16 %v854
    %v951 = vpack.c.b16 %v904, %v903
    %v952 = vpack.c.b16 %v906, %v905
    %v953 = vpack.c.b16 %v908, %v907
    %v954 = vpack.c.b16 %v910, %v909
    %v955 = vpack.c.b16 %v912, %v911
    %v956 = vpack.c.b16 %v914, %v913
    %v957 = vpack.c.b16 %v916, %v915
    %v958 = vpack.c.b16 %v918, %v917
    %v959 = vpack.c.b16 %v920, %v919
    %v960 = vpack.c.b16 %v922, %v921
    %v961 = vpack.c.b16 %v924, %v923
    %v962 = vpack.c.b16 %v926, %v925
    %v963 = vpack.c.b16 %v928, %v927
    %v964 = vpack.c.b16 %v930, %v929
    %v965 = vpack.c.b16 %v932, %v931
    %v966 = vpack.c.b16 %v934, %v933
    %v967 = vpack.c.b16 %v936, %v935
    %v968 = vpack.c.b16 %v938, %v937
    %v969 = vpack.c.b16 %v940, %v939
    %v970 = vpack.c.b16 %v942, %v941
    %v971 = vpack.c.b16 %v944, %v943
    %v972 = vpack.c.b16 %v946, %v945
    %v973 = vpack.c.b16 %v948, %v947
    %v974 = vpack.c.b16 %v950, %v949
    %999 = vmatpush.bf16.msra.mxu0 %v958
    %1000 = vmatpush.bf16.msra.mxu0 %v957
    %1001 = vmatpush.bf16.msra.mxu0 %v956
    %1002 = vmatpush.bf16.msra.mxu0 %v955
    %1003 = vmatpush.bf16.msra.mxu0 %v954
    %1004 = vmatpush.bf16.msra.mxu0 %v953
    %1005 = vmatpush.bf16.msra.mxu0 %v952
    %1006 = vmatpush.bf16.msra.mxu0 %v951
    %1007 = vmatmul.bf16.gmra.mxu0 %v804
    %v1008 = vpop.f32.mrf.mxu0
    %v1009 = vadd.f32 0.0, %v1008
    %v1010 = vpop.f32.mrf.mxu0
    %1011 = vdwg.mxu0
    %1012 = vmatpush.bf16.msra.mxu0 %v966
    %1013 = vmatpush.bf16.msra.mxu0 %v965
    %1014 = vmatpush.bf16.msra.mxu0 %v964
    %1015 = vmatpush.bf16.msra.mxu0 %v963
    %1016 = vmatpush.bf16.msra.mxu0 %v962
    %1017 = vmatpush.bf16.msra.mxu0 %v961
    %1018 = vmatpush.bf16.msra.mxu0 %v960
    %1019 = vmatpush.bf16.msra.mxu0 %v959
    %1020 = vmatmul.bf16.gmra.mxu0 %v805
    %v1021 = vpop.f32.mrf.mxu0
    %v1022 = vadd.f32 %v1009, %v1021
    %v1023 = vpop.f32.mrf.mxu0
    %1024 = vdwg.mxu0
    %1025 = vmatpush.bf16.msra.mxu0 %v974
    %1026 = vmatpush.bf16.msra.mxu0 %v973
    %1027 = vmatpush.bf16.msra.mxu0 %v972
    %1028 = vmatpush.bf16.msra.mxu0 %v971
    %1029 = vmatpush.bf16.msra.mxu0 %v970
    %1030 = vmatpush.bf16.msra.mxu0 %v969
    %1031 = vmatpush.bf16.msra.mxu0 %v968
    %1032 = vmatpush.bf16.msra.mxu0 %v967
    %1033 = vmatmul.bf16.gmra.mxu0 %v806
    %v1034 = vpop.f32.mrf.mxu0
    %v1035 = vadd.f32 %v1022, %v1034
    %v1036 = vpop.f32.mrf.mxu0
    %1037 = vdwg.mxu0
    %v1038 = vmax.f32 %v1035, 0.0
    %v1039 = vld [vmem:[%s3] sm:$0xf]
    %v1040 = vld [vmem:[%s3 + $0x4] sm:$0xf]
    %v1041 = vld [vmem:[%s3 + $0x8] sm:$0xf]
    %v1042 = vld [vmem:[%s3 + $0xc] sm:$0xf]
    %v1043 = vld [vmem:[%s3 + $0x10] sm:$0xf]
    %v1044 = vld [vmem:[%s3 + $0x14] sm:$0xf]
    %v1045 = vld [vmem:[%s3 + $0x18] sm:$0xf]
    %v1046 = vld [vmem:[%s3 + $0x1c] sm:$0xf]
    %v1047 = vld [vmem:[%s3 + $0x20] sm:$0xf]
    %v1048 = vld [vmem:[%s3 + $0x24] sm:$0xf]
    %v1049 = vld [vmem:[%s3 + $0x28] sm:$0xf]
    %v1050 = vld [vmem:[%s3 + $0x2c] sm:$0xf]
    %v1051 = vld [vmem:[%s3 + $0x30] sm:$0xf]
    %v1052 = vld [vmem:[%s3 + $0x34] sm:$0xf]
    %v1053 = vld [vmem:[%s3 + $0x38] sm:$0xf]
    %v1054 = vld [vmem:[%s3 + $0x3c] sm:$0xf]
    %v1055 = vld [vmem:[%s3 + $0x40] sm:$0xf]
    %v1056 = vpack.c.bf16 %v1038, %v1038
    %v1057 = vunpack.c.l.bf16 %v1055
    %v1058 = vperm.slane %v1057, 0
    %v1075 = vunpack.c.l.b16 %v1039
    %v1076 = vunpack.c.l.b16 %v1040
    %v1077 = vunpack.c.l.b16 %v1041
    %v1078 = vunpack.c.l.b16 %v1042
    %v1079 = vunpack.c.l.b16 %v1043
    %v1080 = vunpack.c.l.b16 %v1044
    %v1081 = vunpack.c.l.b16 %v1045
    %v1082 = vunpack.c.l.b16 %v1046
    %v1083 = vunpack.c.l.b16 %v1047
    %v1084 = vunpack.c.l.b16 %v1048
    %v1085 = vunpack.c.l.b16 %v1049
    %v1086 = vunpack.c.l.b16 %v1050
    %v1087 = vunpack.c.l.b16 %v1051
    %v1088 = vunpack.c.l.b16 %v1052
    %v1089 = vunpack.c.l.b16 %v1053
    %v1090 = vunpack.c.l.b16 %v1054
    %v1091 = vpack.c.b16 %v1076, %v1075
    %v1092 = vpack.c.b16 %v1078, %v1077
    %v1093 = vpack.c.b16 %v1080, %v1079
    %v1094 = vpack.c.b16 %v1082, %v1081
    %v1095 = vpack.c.b16 %v1084, %v1083
    %v1096 = vpack.c.b16 %v1086, %v1085
    %v1097 = vpack.c.b16 %v1088, %v1087
    %v1098 = vpack.c.b16 %v1090, %v1089
    %1107 = vmatpush.bf16.msra.mxu0 %v1098
    %1108 = vmatpush.bf16.msra.mxu0 %v1097
    %1109 = vmatpush.bf16.msra.mxu0 %v1096
    %1110 = vmatpush.bf16.msra.mxu0 %v1095
    %1111 = vmatpush.bf16.msra.mxu0 %v1094
    %1112 = vmatpush.bf16.msra.mxu0 %v1093
    %1113 = vmatpush.bf16.msra.mxu0 %v1092
    %1114 = vmatpush.bf16.msra.mxu0 %v1091
    %1115 = vmatmul.bf16.gmra.mxu0 %v1056
    %v1116 = vpop.f32.mrf.mxu0
    %v1117 = vadd.f32 %v1058, %v1116
    %v1118 = vpop.f32.mrf.mxu0
    %1119 = vdwg.mxu0
    %1120 = vst [vmem:[%s4] sm:$0xff] %v1117
    // Predicated region
    $region26: #{module1_forward.1} parent=1 // pred_check
      _
    $region27: #{module1_forward.1} parent=1 // pred_check_branch
      %1122 = sbr.rel (0) target = $region29
    $region28: #{module1_forward.1} parent=1 // pred_region
      _
    $region29: #{module1_forward.1} parent=1 // pred_fallthru
      _
    // Predicated region
    $region30: #{module1_forward.1} parent=1 // pred_check
      _
    $region31: #{module1_forward.1} parent=1 // pred_check_branch
      %1124 = sbr.rel (0) target = $region33
    $region32: #{module1_forward.1} parent=1 // pred_region
      _
    $region33: #{module1_forward.1} parent=1 // pred_fallthru
      _
    %1125 = vsyncpa [#allocation3], 1
    %1126 = vsyncpa [#allocation5], 1

</llo_original>
